<compile_context>
chip_gen: v6e
topology: v6e:2x2x1
jax: 0.10.0
libtpu: 0.0.40
codegen_flags: <defaults>
</compile_context>

<pallas_src>
import functools

import jax
import jax.numpy as jnp
from jax.experimental import pallas as pl
from jax.experimental.pallas import tpu as pltpu


def _round_up(n, m):
    return ((n + m - 1) // m) * m


def dqn_kernel(x_ref, w1_ref, b1_ref, w2_ref, b2_ref, out_ref, *, input_n):
    x = x_ref[...]                       # (TB, input_n)   f32
    w1 = w1_ref[...]                     # (input_n, H_PAD)
    tb = x.shape[0]
    h_pad = w1.shape[1]

    # Layer 1 on the VPU: contraction depth is tiny (input_n), so do it as
    # broadcast FMAs instead of pushing a 3-deep matmul through the MXU.
    h = jnp.broadcast_to(b1_ref[...], (tb, h_pad))
    for j in range(input_n):             # static, small unroll
        h = h + x[:, j:j + 1] * w1[j:j + 1, :]

    h = jnp.tanh(h)                      # EUP, full 128-wide vregs

    # Layer 2 on the MXU (K = H_PAD = 128 after padding).
    q = jnp.dot(h, w2_ref[...], preferred_element_type=jnp.float32) + b2_ref[...]
    out_ref[...] = q.astype(out_ref.dtype)   # lane-dense (TB, 128) store


def dqn_forward(x, w1, b1, w2, b2, *, block_b=128):
    """x: (B, input_n); w1: (input_n, h); b1: (1, h); w2: (h, A); b2: (1, A)."""
    B, input_n = x.shape
    h_size, num_actions = w2.shape

    H_PAD = _round_up(max(h_size, 1), 128)
    N_PAD = _round_up(max(num_actions, 1), 128)

    # Batch tile: multiple of 8 sublanes, capped at block_b.
    TB = min(block_b, _round_up(B, 8))
    B_PAD = _round_up(B, TB)

    def pad_to(a, shape):
        return jnp.pad(a, [(0, s - d) for d, s in zip(a.shape, shape)])

    x_p = pad_to(x.astype(jnp.float32), (B_PAD, input_n))
    w1_p = pad_to(w1.astype(jnp.float32), (input_n, H_PAD))
    b1_p = pad_to(b1.astype(jnp.float32), (1, H_PAD))
    w2_p = pad_to(w2.astype(jnp.float32), (H_PAD, N_PAD))
    b2_p = pad_to(b2.astype(jnp.float32), (1, N_PAD))

    grid = (pl.cdiv(B_PAD, TB),)

    out = pl.pallas_call(
        functools.partial(dqn_kernel, input_n=input_n),
        out_shape=jax.ShapeDtypeStruct((B_PAD, N_PAD), jnp.float32),
        grid=grid,
        in_specs=[
            pl.BlockSpec((TB, input_n), lambda i: (i, 0)),      # x: tiled over batch
            pl.BlockSpec((input_n, H_PAD), lambda i: (0, 0)),   # w1: resident
            pl.BlockSpec((1, H_PAD), lambda i: (0, 0)),         # b1: resident
            pl.BlockSpec((H_PAD, N_PAD), lambda i: (0, 0)),     # w2: resident
            pl.BlockSpec((1, N_PAD), lambda i: (0, 0)),         # b2: resident
        ],
        out_specs=pl.BlockSpec((TB, N_PAD), lambda i: (i, 0)),
        compiler_params=pltpu.CompilerParams(
            dimension_semantics=("parallel",)),                  # v7x: 2 TCs share batch
    )(x_p, w1_p, b1_p, w2_p, b2_p)

    return out[:B, :num_actions]


def init_params(key, input_n, num_actions, h_size=24):
    # Deterministic synthetic init (uniform, like PyTorch's default scheme).
    k1, k2, k3, k4 = jax.random.split(key, 4)
    bound1 = 1.0 / jnp.sqrt(input_n)
    bound2 = 1.0 / jnp.sqrt(h_size)
    w1 = jax.random.uniform(k1, (input_n, h_size), jnp.float32, -bound1, bound1)
    b1 = jax.random.uniform(k2, (1, h_size), jnp.float32, -bound1, bound1)
    w2 = jax.random.uniform(k3, (h_size, num_actions), jnp.float32, -bound2, bound2)
    b2 = jax.random.uniform(k4, (1, num_actions), jnp.float32, -bound2, bound2)
    return w1, b1, w2, b2


if __name__ == "__main__":
    # Pendulum-v0: observation dim = 3; small discretized action count.
    input_n = 3
    num_actions = 5
    h_size = 24

    key = jax.random.PRNGKey(0)
    kx, kp = jax.random.split(key)
    w1, b1, w2, b2 = init_params(kp, input_n, num_actions, h_size)

    # Small batch (single grid step) and a larger, non-aligned batch that
    # exercises the batch grid + row padding path.
    for batch in (8, 300):
        kxi = jax.random.fold_in(kx, batch)
        x = jax.random.uniform(kxi, (batch, input_n), jnp.float32, -1.0, 1.0)

        out = dqn_forward(x, w1, b1, w2, b2)
        out = jax.block_until_ready(out)

        # Pure-JAX reference of the same forward semantics.
        ref = jnp.tanh(x @ w1 + b1) @ w2 + b2
        assert out.shape == (batch, num_actions)
        assert jnp.allclose(out, ref, atol=1e-5, rtol=1e-5), f"mismatch at B={batch}"

    # TODO(synk): act()'s epsilon-greedy sampling is host-side control flow
    # (random.random / argmax .item()) and is intentionally not in the kernel.
    print("KERNEL_OK")
</pallas_src>

<mosaic_0001>
module attributes {stable_mosaic.version = 11 : i64} {
  func.func @dqn_kernel(%arg0: i32, %arg1: memref<8x3xf32, #tpu.memory_space<vmem>>, %arg2: memref<3x128xf32, #tpu.memory_space<vmem>>, %arg3: memref<1x128xf32, #tpu.memory_space<vmem>>, %arg4: memref<128x128xf32, #tpu.memory_space<vmem>>, %arg5: memref<1x128xf32, #tpu.memory_space<vmem>>, %arg6: memref<8x128xf32, #tpu.memory_space<vmem>>) attributes {dimension_semantics = [#tpu.dimension_semantics<parallel>], iteration_bounds = array<i64: 1>, scalar_prefetch = 0 : i64, scratch_operands = 0 : i64, tpu.core_type = #tpu.core_type<tc>, window_params = [{transform_indices = @transform_0, window_bounds = array<i64: 8, 3>}, {pipeline_mode = #tpu.pipeline_mode<synchronous>, transform_indices = @transform_1, window_bounds = array<i64: 3, 128>}, {pipeline_mode = #tpu.pipeline_mode<synchronous>, transform_indices = @transform_2, window_bounds = array<i64: 1, 128>}, {pipeline_mode = #tpu.pipeline_mode<synchronous>, transform_indices = @transform_3, window_bounds = array<i64: 128, 128>}, {pipeline_mode = #tpu.pipeline_mode<synchronous>, transform_indices = @transform_4, window_bounds = array<i64: 1, 128>}, {transform_indices = @transform_5, window_bounds = array<i64: 8, 128>}]} {
    %c0 = arith.constant 0 : index
    %c0_0 = arith.constant 0 : index
    %0 = vector.load %arg1[%c0, %c0_0] : memref<8x3xf32, #tpu.memory_space<vmem>>, vector<8x3xf32>
    %c0_1 = arith.constant 0 : index
    %c0_2 = arith.constant 0 : index
    %1 = vector.load %arg2[%c0_1, %c0_2] : memref<3x128xf32, #tpu.memory_space<vmem>>, vector<3x128xf32>
    %c0_3 = arith.constant 0 : index
    %c0_4 = arith.constant 0 : index
    %2 = vector.load %arg3[%c0_3, %c0_4] : memref<1x128xf32, #tpu.memory_space<vmem>>, vector<1x128xf32>
    %3 = vector.shape_cast %2 : vector<1x128xf32> to vector<1x128xf32>
    %4 = vector.broadcast %3 : vector<1x128xf32> to vector<8x128xf32>
    %5 = vector.extract_strided_slice %0 {offsets = [0, 0], sizes = [8, 1], strides = [1, 1]} : vector<8x3xf32> to vector<8x1xf32>
    %6 = vector.extract_strided_slice %1 {offsets = [0, 0], sizes = [1, 128], strides = [1, 1]} : vector<3x128xf32> to vector<1x128xf32>
    %7 = vector.broadcast %5 : vector<8x1xf32> to vector<8x128xf32>
    %8 = vector.broadcast %6 : vector<1x128xf32> to vector<8x128xf32>
    %9 = arith.mulf %7, %8 : vector<8x128xf32>
    %10 = arith.addf %4, %9 : vector<8x128xf32>
    %11 = vector.extract_strided_slice %0 {offsets = [0, 1], sizes = [8, 1], strides = [1, 1]} : vector<8x3xf32> to vector<8x1xf32>
    %12 = vector.extract_strided_slice %1 {offsets = [1, 0], sizes = [1, 128], strides = [1, 1]} : vector<3x128xf32> to vector<1x128xf32>
    %13 = vector.broadcast %11 : vector<8x1xf32> to vector<8x128xf32>
    %14 = vector.broadcast %12 : vector<1x128xf32> to vector<8x128xf32>
    %15 = arith.mulf %13, %14 : vector<8x128xf32>
    %16 = arith.addf %10, %15 : vector<8x128xf32>
    %17 = vector.extract_strided_slice %0 {offsets = [0, 2], sizes = [8, 1], strides = [1, 1]} : vector<8x3xf32> to vector<8x1xf32>
    %18 = vector.extract_strided_slice %1 {offsets = [2, 0], sizes = [1, 128], strides = [1, 1]} : vector<3x128xf32> to vector<1x128xf32>
    %19 = vector.broadcast %17 : vector<8x1xf32> to vector<8x128xf32>
    %20 = vector.broadcast %18 : vector<1x128xf32> to vector<8x128xf32>
    %21 = arith.mulf %19, %20 : vector<8x128xf32>
    %22 = arith.addf %16, %21 : vector<8x128xf32>
    %23 = math.tanh %22 : vector<8x128xf32>
    %c0_5 = arith.constant 0 : index
    %c0_6 = arith.constant 0 : index
    %24 = vector.load %arg4[%c0_5, %c0_6] : memref<128x128xf32, #tpu.memory_space<vmem>>, vector<128x128xf32>
    %cst = arith.constant dense<0.000000e+00> : vector<8x128xf32>
    %25 = tpu.matmul %23, %24, %cst {dimension_numbers = #tpu.dot_dimension_numbers<[1], [0], [0], [1], [0, 0, 1, 1], [], []>} : vector<8x128xf32>, vector<128x128xf32>, vector<8x128xf32> -> vector<8x128xf32>
    %c0_7 = arith.constant 0 : index
    %c0_8 = arith.constant 0 : index
    %26 = vector.load %arg5[%c0_7, %c0_8] : memref<1x128xf32, #tpu.memory_space<vmem>>, vector<1x128xf32>
    %27 = vector.broadcast %26 : vector<1x128xf32> to vector<8x128xf32>
    %28 = arith.addf %25, %27 : vector<8x128xf32>
    %c0_9 = arith.constant 0 : index
    %c0_10 = arith.constant 0 : index
    %29 = vector.load %arg6[%c0_9, %c0_10] : memref<8x128xf32, #tpu.memory_space<vmem>>, vector<8x128xf32>
    tpu.vector_store %arg6[%c0_9, %c0_10], %28 {strides = array<i32>} : memref<8x128xf32, #tpu.memory_space<vmem>>, vector<8x128xf32>,
    return
  }
  func.func @transform_0(%arg0: i32) -> (i32, i32) {
    %c0_i32 = arith.constant 0 : i32
    %c0_i32_0 = arith.constant 0 : i32
    return %arg0, %c0_i32 : i32, i32
  }
  func.func @transform_1(%arg0: i32) -> (i32, i32) {
    %c0_i32 = arith.constant 0 : i32
    %c0_i32_0 = arith.constant 0 : i32
    %c0_i32_1 = arith.constant 0 : i32
    return %c0_i32, %c0_i32_0 : i32, i32
  }
  func.func @transform_2(%arg0: i32) -> (i32, i32) {
    %c0_i32 = arith.constant 0 : i32
    %c0_i32_0 = arith.constant 0 : i32
    %c0_i32_1 = arith.constant 0 : i32
    return %c0_i32, %c0_i32_0 : i32, i32
  }
  func.func @transform_3(%arg0: i32) -> (i32, i32) {
    %c0_i32 = arith.constant 0 : i32
    %c0_i32_0 = arith.constant 0 : i32
    %c0_i32_1 = arith.constant 0 : i32
    return %c0_i32, %c0_i32_0 : i32, i32
  }
  func.func @transform_4(%arg0: i32) -> (i32, i32) {
    %c0_i32 = arith.constant 0 : i32
    %c0_i32_0 = arith.constant 0 : i32
    %c0_i32_1 = arith.constant 0 : i32
    return %c0_i32, %c0_i32_0 : i32, i32
  }
  func.func @transform_5(%arg0: i32) -> (i32, i32) {
    %c0_i32 = arith.constant 0 : i32
    %c0_i32_0 = arith.constant 0 : i32
    return %arg0, %c0_i32 : i32, i32
  }
}

</mosaic_0001>

<llo_original>
// kernel: tpu_custom_call.1
$region0: #{tpu_custom_call.1}
  #allocation0 [shape = 'u32[]', space=smem, size = 0x4, offset = 0x4, fixed_abs, tag = 'smem constant byte address 0x4 - core index']
  #allocation1 [shape = 'u32[144,128]{1,0:T(1,128)}', space=vmem, size = 0x12000, scoped, tag = 'internal scratch']
  %s0 = inlined_call_operand.vmem [shape: f32[8,3], index: 0, kind: input, shape index: {}]
  %s1 = inlined_call_operand.vmem [shape: f32[3,128], index: 1, kind: input, shape index: {}]
  %s2 = inlined_call_operand.vmem [shape: f32[1,128], index: 2, kind: input, shape index: {}]
  %s3 = inlined_call_operand.hbm [shape: f32[128,128], index: 3, kind: input, shape index: {}]
  %s4 = inlined_call_operand.vmem [shape: f32[1,128], index: 4, kind: input, shape index: {}]
  %s5 = inlined_call_operand.hbm [shape: f32[8,128], index: 5, kind: output, shape index: {}]
  %s6 = sld [smem:[#allocation0]]
  $region34: #{tpu_custom_call.1} parent=0
    _
  %s8 = ssub.s32 1, %s6
  %s9 = scalar_select 0, %s8, %s6
  $region1: #{tpu_custom_call.1} parent=0
    #allocation2 [shape = 'u8[65536]{0}', space=vmem, size = 0x10000, scoped, tag = 'input window, operand 3, single buffered']
    #allocation3 [shape = 's32[1]{0}', space=sflag, size = 0x4, scoped, tag = 'scoped memory for tpu_custom_call.1']
    #allocation4 [shape = 's32[1]{0}', space=sflag, size = 0x4, scoped, tag = 'scoped memory for tpu_custom_call.1']
    #allocation5 [shape = 'u8[4096]{0}', space=vmem, size = 0x1000, scoped, tag = 'output window, operand 0, single buffered']
    %10 = vsyncpa [#allocation3], 0
    %11 = vsyncpa [#allocation4], 0
    // Predicated region
    $region2: #{tpu_custom_call.1} parent=1 // pred_check
      _
    $region3: #{tpu_custom_call.1} parent=1 // pred_check_branch
      %13 = sbr.rel (0) target = $region5
    $region4: #{tpu_custom_call.1} parent=1 // pred_region
      _
    $region5: #{tpu_custom_call.1} parent=1 // pred_fallthru
      _
    // Predicated region
    $region6: #{tpu_custom_call.1} parent=1 // pred_check
      _
    $region7: #{tpu_custom_call.1} parent=1 // pred_check_branch
      %15 = sbr.rel (0) target = $region9
    $region8: #{tpu_custom_call.1} parent=1 // pred_region
      _
    $region9: #{tpu_custom_call.1} parent=1 // pred_fallthru
      _
    // Predicated region
    $region10: #{tpu_custom_call.1} parent=1 // pred_check
      _
    $region11: #{tpu_custom_call.1} parent=1 // pred_check_branch
      %17 = sbr.rel (0) target = $region13
    $region12: #{tpu_custom_call.1} parent=1 // pred_region
      _
    $region13: #{tpu_custom_call.1} parent=1 // pred_fallthru
      _
    // Predicated region
    $region14: #{tpu_custom_call.1} parent=1 // pred_check
      _
    $region15: #{tpu_custom_call.1} parent=1 // pred_check_branch
      %19 = sbr.rel (0) target = $region17
    $region16: #{tpu_custom_call.1} parent=1 // pred_region
      %s21 = ssub.s32 2048, 2048
      %22 = vsyncadd [#allocation3], %s21
      %s23 = sshll.u32 [#allocation2], 4
      %s24 = int_to_ptr.vmem [resolvable:$true] %s23
      %29 = dma.hbm_to_vmem [thread:$0]  %s3, 2048, %s24, [#allocation3], 128, 128, 8
    $region17: #{tpu_custom_call.1} parent=1 // pred_fallthru
      _
    // Predicated region
    $region18: #{tpu_custom_call.1} parent=1 // pred_check
      _
    $region19: #{tpu_custom_call.1} parent=1 // pred_check_branch
      %31 = sbr.rel (0) target = $region21
    $region20: #{tpu_custom_call.1} parent=1 // pred_region
      _
    $region21: #{tpu_custom_call.1} parent=1 // pred_fallthru
      _
    // Predicated region
    $region22: #{tpu_custom_call.1} parent=1 // pred_check
      _
    $region23: #{tpu_custom_call.1} parent=1 // pred_check_branch
      %33 = sbr.rel (0) target = $region25
    $region24: #{tpu_custom_call.1} parent=1 // pred_region
      %34 = dma.done [#allocation3], 2048
    $region25: #{tpu_custom_call.1} parent=1 // pred_fallthru
      _
    %v35 = vld [vmem:[%s0] sm:$0xff]
    %v36 = vld [vmem:[%s1] sm:$0x7]
    %v37 = vld [vmem:[%s2] sm:$0x1]
    %v39 = vlaneseq
    %v40 = vshrl.u32 %v39, 7
    %v41 = vsub.s32 0, %v40
    %v42 = vrot.slane %v37, %v41
    %45 = vset.pattern.permute.xlu0 0
    %46 = vperm.xlu0 %45, %v35
    %v47 = vpop.permute.xlu0 %46
    %v49 = vlaneseq
    %v50 = vshrl.u32 %v49, 7
    %v51 = vsub.s32 0, %v50
    %v52 = vrot.slane %v36, %v51
    %v53 = vmul.f32 %v47, %v52
    %v54 = vadd.f32 %v42, %v53
    %55 = vset.pattern.permute.xlu0 1
    %56 = vperm.xlu0 %55, %v35
    %v57 = vpop.permute.xlu0 %56
    %v59 = vlaneseq
    %v60 = vshrl.u32 %v59, 7
    %v61 = vsub.s32 1, %v60
    %v62 = vrot.slane %v36, %v61
    %v63 = vmul.f32 %v57, %v62
    %v64 = vadd.f32 %v54, %v63
    %65 = vset.pattern.permute.xlu0 2
    %66 = vperm.xlu0 %65, %v35
    %v67 = vpop.permute.xlu0 %66
    %v69 = vlaneseq
    %v70 = vshrl.u32 %v69, 7
    %v71 = vsub.s32 2, %v70
    %v72 = vrot.slane %v36, %v71
    %v73 = vmul.f32 %v67, %v72
    %v74 = vadd.f32 %v64, %v73
    %v75 = vtanh.pop %v74
    %v76 = vld [vmem:[#allocation2] sm:$0xff]
    %v77 = vld [vmem:[#allocation2 + $0x8] sm:$0xff]
    %v78 = vld [vmem:[#allocation2 + $0x10] sm:$0xff]
    %v79 = vld [vmem:[#allocation2 + $0x18] sm:$0xff]
    %v80 = vld [vmem:[#allocation2 + $0x20] sm:$0xff]
    %v81 = vld [vmem:[#allocation2 + $0x28] sm:$0xff]
    %v82 = vld [vmem:[#allocation2 + $0x30] sm:$0xff]
    %v83 = vld [vmem:[#allocation2 + $0x38] sm:$0xff]
    %v84 = vld [vmem:[#allocation2 + $0x40] sm:$0xff]
    %v85 = vld [vmem:[#allocation2 + $0x48] sm:$0xff]
    %v86 = vld [vmem:[#allocation2 + $0x50] sm:$0xff]
    %v87 = vld [vmem:[#allocation2 + $0x58] sm:$0xff]
    %v88 = vld [vmem:[#allocation2 + $0x60] sm:$0xff]
    %v89 = vld [vmem:[#allocation2 + $0x68] sm:$0xff]
    %v90 = vld [vmem:[#allocation2 + $0x70] sm:$0xff]
    %v91 = vld [vmem:[#allocation2 + $0x78] sm:$0xff]
    %v92 = vld [vmem:[%s4] sm:$0x1]
    %v94 = vlaneseq
    %v95 = vshrl.u32 %v94, 7
    %v96 = vsub.s32 0, %v95
    %v97 = vrot.slane %v92, %v96
    %99 = vmatprep.subr.mxu0 0.0
    %100 = vmatpush1.msra.mxu0 %v91
    %101 = vmatprep.subr.mxu0 0.0
    %102 = vmatpush1.msra.mxu0 %v90
    %103 = vmatprep.subr.mxu0 0.0
    %104 = vmatpush1.msra.mxu0 %v89
    %105 = vmatprep.subr.mxu0 0.0
    %106 = vmatpush1.msra.mxu0 %v88
    %107 = vmatprep.subr.mxu0 0.0
    %108 = vmatpush1.msra.mxu0 %v87
    %109 = vmatprep.subr.mxu0 0.0
    %110 = vmatpush1.msra.mxu0 %v86
    %111 = vmatprep.subr.mxu0 0.0
    %112 = vmatpush1.msra.mxu0 %v85
    %113 = vmatprep.subr.mxu0 0.0
    %114 = vmatpush1.msra.mxu0 %v84
    %115 = vmatprep.subr.mxu0 0.0
    %116 = vmatpush1.msra.mxu0 %v83
    %117 = vmatprep.subr.mxu0 0.0
    %118 = vmatpush1.msra.mxu0 %v82
    %119 = vmatprep.subr.mxu0 0.0
    %120 = vmatpush1.msra.mxu0 %v81
    %121 = vmatprep.subr.mxu0 0.0
    %122 = vmatpush1.msra.mxu0 %v80
    %123 = vmatprep.subr.mxu0 0.0
    %124 = vmatpush1.msra.mxu0 %v79
    %125 = vmatprep.subr.mxu0 0.0
    %126 = vmatpush1.msra.mxu0 %v78
    %127 = vmatprep.subr.mxu0 0.0
    %128 = vmatpush1.msra.mxu0 %v77
    %129 = vmatprep.subr.mxu0 0.0
    %130 = vmatpush1.msra.mxu0 %v76
    %131 = vmatprep.subr.mxu0 0.0
    %132 = vmatpush2.msra.mxu0 0.0
    %133 = vmatprep.subr.mxu0 0.0
    %134 = vmatpush2.msra.mxu0 0.0
    %135 = vmatprep.subr.mxu0 0.0
    %136 = vmatpush2.msra.mxu0 0.0
    %137 = vmatprep.subr.mxu0 0.0
    %138 = vmatpush2.msra.mxu0 0.0
    %139 = vmatprep.subr.mxu0 0.0
    %140 = vmatpush2.msra.mxu0 0.0
    %141 = vmatprep.subr.mxu0 0.0
    %142 = vmatpush2.msra.mxu0 0.0
    %143 = vmatprep.subr.mxu0 0.0
    %144 = vmatpush2.msra.mxu0 0.0
    %145 = vmatprep.subr.mxu0 0.0
    %146 = vmatpush2.msra.mxu0 0.0
    %147 = vmatprep.subr.mxu0 0.0
    %148 = vmatpush2.msra.mxu0 0.0
    %149 = vmatprep.subr.mxu0 0.0
    %150 = vmatpush2.msra.mxu0 0.0
    %151 = vmatprep.subr.mxu0 0.0
    %152 = vmatpush2.msra.mxu0 0.0
    %153 = vmatprep.subr.mxu0 0.0
    %154 = vmatpush2.msra.mxu0 0.0
    %155 = vmatprep.subr.mxu0 0.0
    %156 = vmatpush2.msra.mxu0 0.0
    %157 = vmatprep.subr.mxu0 0.0
    %158 = vmatpush2.msra.mxu0 0.0
    %159 = vmatprep.subr.mxu0 0.0
    %160 = vmatpush2.msra.mxu0 0.0
    %161 = vmatprep.subr.mxu0 0.0
    %162 = vmatpush2.msra.mxu0 0.0
    %163 = vmatprep.mubr.f32.mxu0 0.0
    %164 = vmatmul.mubr.f32.gmra.mxu0 %v75
    %v165 = vpop.f32.mrf.mxu0
    %v166 = vadd.f32 %v97, %v165
    %v167 = vpop.f32.mrf.mxu0
    %168 = vdwg.mxu0
    %169 = vst [vmem:[#allocation5] sm:$0xff] %v166
    // Predicated region
    $region26: #{tpu_custom_call.1} parent=1 // pred_check
      _
    $region27: #{tpu_custom_call.1} parent=1 // pred_check_branch
      %171 = sbr.rel (0) target = $region29
    $region28: #{tpu_custom_call.1} parent=1 // pred_region
      %s173 = ssub.s32 128, 128
      %174 = vsyncadd [#allocation4], %s173
      %s176 = sshll.u32 [#allocation5], 4
      %s177 = int_to_ptr.vmem [resolvable:$true] %s176
      %179 = dma.vmem_to_hbm [thread:$0]  %s177, 128, %s5, [#allocation4]
    $region29: #{tpu_custom_call.1} parent=1 // pred_fallthru
      _
    // Predicated region
    $region30: #{tpu_custom_call.1} parent=1 // pred_check
      _
    $region31: #{tpu_custom_call.1} parent=1 // pred_check_branch
      %181 = sbr.rel (0) target = $region33
    $region32: #{tpu_custom_call.1} parent=1 // pred_region
      %182 = dma.done [#allocation4], 128
    $region33: #{tpu_custom_call.1} parent=1 // pred_fallthru
      _
    %183 = vsyncpa [#allocation3], 1
    %184 = vsyncpa [#allocation4], 1

</llo_original>
